<compile_context>
chip_gen: v7x
topology: tpu7x:2x2x1
jax: 0.10.0
libtpu: 0.0.40
codegen_flags: <defaults>
</compile_context>

<pallas_src>
import functools

import jax
import jax.numpy as jnp
from jax import lax
from jax.experimental import pallas as pl
from jax.experimental.pallas import tpu as pltpu

_CIN_PAD = 8  # pad the 2 conv input channels to one sublane group


def _round_up(x, m):
    return (x + m - 1) // m * m


def _attention_conv_kernel(x_ref, w_ref, o_ref, *, K, T_tile, sub):
    # x_ref : (T_ext, 8)        zero-padded, time-major input row (resident per batch)
    # w_ref : (K, 8, Cout)      fused conv@linear weight (resident across the grid)
    # o_ref : (T_tile, Cout)    time-major output tile (Cout on the lane axis)
    base = pl.multiple_of(pl.program_id(1) * T_tile, T_tile)
    n_sub = T_tile // sub
    for s in range(n_sub):                       # static; caps acc live range
        start = pl.multiple_of(base + s * sub, sub)
        acc = jnp.zeros((sub, o_ref.shape[1]), jnp.float32)
        for j in range(K):                       # static unroll; taps feed the MXU
            xj = x_ref[pl.ds(start + j, sub), :].astype(jnp.float32)   # (sub, 8)
            wj = w_ref[j].astype(jnp.float32)                          # (8, Cout)
            acc = acc + jnp.dot(xj, wj, preferred_element_type=jnp.float32)
        o_ref[pl.ds(s * sub, sub), :] = acc.astype(o_ref.dtype)


def attention_conv(weights, w_conv, w_lin, kernel_size, out_dtype=None):
    """weights: (B, 2, T), w_conv: (F, 2, K), w_lin: (Cout, F) -> (B, T, Cout)."""
    B, Cin, T = weights.shape
    F, Cin_w, K = w_conv.shape
    Cout = w_lin.shape[0]
    assert Cin_w == Cin and K == kernel_size
    # PyTorch Conv1d with padding=(K-1)//2 only keeps length T for odd K.
    assert K % 2 == 1, "AttentionConv expects an odd kernel_size"
    pad_l = (K - 1) // 2
    out_dtype = weights.dtype if out_dtype is None else out_dtype

    # ---- wrapper glue (tiny tensors, runs once per call) ---------------------
    # Fuse conv and linear (valid: both bias-free, no nonlinearity between them):
    #   w_fused[k, ci, co] = sum_f w_lin[co, f] * w_conv[f, ci, k]
    w_fused = jnp.einsum("of,fck->kco", w_lin, w_conv).astype(jnp.float32)
    w_pad = jnp.zeros((K, _CIN_PAD, Cout), jnp.float32).at[:, :Cin, :].set(w_fused)

    T_pad = _round_up(T, 128)
    T_tile = next(c for c in (1024, 512, 256, 128) if T_pad % c == 0)
    nT = T_pad // T_tile
    T_ext = T_pad + K - 1

    # Single zero-padded, time-major input (the input is tiny: B*2*T elements).
    # Left zeros implement the 'same' conv padding; the right tail just pads T_pad.
    x_tm = jnp.zeros((B, T_ext, _CIN_PAD), weights.dtype)
    x_tm = x_tm.at[:, pad_l:pad_l + T, :Cin].set(jnp.transpose(weights, (0, 2, 1)))

    kern = functools.partial(_attention_conv_kernel, K=K, T_tile=T_tile,
                             sub=min(T_tile, 128))

    out = pl.pallas_call(
        kern,
        out_shape=jax.ShapeDtypeStruct((B, T_pad, Cout), out_dtype),
        grid=(B, nT),
        in_specs=[
            # Full per-batch time row; index_map constant in t -> resident, one DMA
            # per batch element, sliced in-kernel with pl.ds.
            pl.BlockSpec((None, T_ext, _CIN_PAD), lambda b, t: (b, 0, 0)),
            # Fused weight, resident across the whole grid (full-dim block).
            pl.BlockSpec((K, _CIN_PAD, Cout), lambda b, t: (0, 0, 0)),
        ],
        # Time-major output: no wrapper transpose; lane-dense when Cout % 128 == 0.
        out_specs=pl.BlockSpec((None, T_tile, Cout), lambda b, t: (b, t, 0)),
        compiler_params=pltpu.CompilerParams(
            dimension_semantics=("parallel", "parallel")),
    )(x_tm, w_pad)

    return out[:, :T, :] if T_pad != T else out


def _reference(weights, w_conv, w_lin, kernel_size):
    pad = (kernel_size - 1) // 2
    conv = lax.conv_general_dilated(
        weights, w_conv, window_strides=(1,), padding=[(pad, pad)],
        dimension_numbers=("NCH", "OIH", "NCH"))
    att = jnp.transpose(conv, (0, 2, 1))
    return jnp.einsum("btf,of->bto", att, w_lin)


if __name__ == "__main__":
    # Small deterministic setup matching the module: batch=2, conv input channels=2
    # (fixed by AttentionConv), seq=16, in_channels(n_filters)=8, out_channels=16, K=3.
    B, T = 2, 16
    in_channels, out_channels, kernel_size = 8, 16, 3

    key = jax.random.PRNGKey(0)
    k1, k2, k3 = jax.random.split(key, 3)

    # Xavier-uniform-like init (both submodules are bias-free).
    fan_in_c, fan_out_c = 2 * kernel_size, in_channels * kernel_size
    bound_c = (6.0 / (fan_in_c + fan_out_c)) ** 0.5
    w_conv = jax.random.uniform(k1, (in_channels, 2, kernel_size),
                                minval=-bound_c, maxval=bound_c, dtype=jnp.float32)
    gain = 5.0 / 3.0
    bound_l = gain * (6.0 / (in_channels + out_channels)) ** 0.5
    w_lin = jax.random.uniform(k2, (out_channels, in_channels),
                               minval=-bound_l, maxval=bound_l, dtype=jnp.float32)

    weights = jax.random.normal(k3, (B, 2, T), dtype=jnp.float32)

    out = attention_conv(weights, w_conv, w_lin, kernel_size)
    out = jax.block_until_ready(out)

    ref = _reference(weights, w_conv, w_lin, kernel_size)
    assert out.shape == (B, T, out_channels), out.shape
    assert jnp.allclose(out, ref, atol=1e-5, rtol=1e-5), float(jnp.max(jnp.abs(out - ref)))
    print("KERNEL_OK")
</pallas_src>

<mosaic_0001>
module attributes {stable_mosaic.version = 11 : i64} {
  func.func @_attention_conv_kernel(%arg0: i32, %arg1: i32, %arg2: memref<1x130x8xf32, #tpu.memory_space<vmem>>, %arg3: memref<3x8x16xf32, #tpu.memory_space<vmem>>, %arg4: memref<1x128x16xf32, #tpu.memory_space<vmem>>) attributes {dimension_semantics = [#tpu.dimension_semantics<parallel>, #tpu.dimension_semantics<parallel>], iteration_bounds = array<i64: 2, 1>, scalar_prefetch = 0 : i64, scratch_operands = 0 : i64, tpu.core_type = #tpu.core_type<tc>, window_params = [{transform_indices = @transform_0, window_bounds = array<i64: 1, 130, 8>}, {pipeline_mode = #tpu.pipeline_mode<synchronous>, transform_indices = @transform_1, window_bounds = array<i64: 3, 8, 16>}, {transform_indices = @transform_2, window_bounds = array<i64: 1, 128, 16>}]} {
    %c128_i32 = arith.constant 128 : i32
    %0 = arith.muli %arg1, %c128_i32 : i32
    %1 = tpu.assume_multiple %0, 128 : i32
    %c0_i32 = arith.constant 0 : i32
    %2 = arith.addi %1, %c0_i32 : i32
    %3 = tpu.assume_multiple %2, 128 : i32
    %cst = arith.constant 0.000000e+00 : f32
    %4 = vector.broadcast %cst : f32 to vector<128x16xf32>
    %c0_i32_0 = arith.constant 0 : i32
    %5 = arith.addi %3, %c0_i32_0 : i32
    %c0 = arith.constant 0 : index
    %6 = arith.index_cast %5 : i32 to index
    %c0_1 = arith.constant 0 : index
    %7 = vector.load %arg2[%c0, %6, %c0_1] : memref<1x130x8xf32, #tpu.memory_space<vmem>>, vector<1x128x8xf32>
    %8 = vector.shape_cast %7 : vector<1x128x8xf32> to vector<128x8xf32>
    %c0_2 = arith.constant 0 : index
    %c0_3 = arith.constant 0 : index
    %c0_4 = arith.constant 0 : index
    %9 = vector.load %arg3[%c0_2, %c0_3, %c0_4] : memref<3x8x16xf32, #tpu.memory_space<vmem>>, vector<1x8x16xf32>
    %10 = vector.shape_cast %9 : vector<1x8x16xf32> to vector<8x16xf32>
    %cst_5 = arith.constant dense<0.000000e+00> : vector<128x16xf32>
    %11 = tpu.matmul %8, %10, %cst_5 {dimension_numbers = #tpu.dot_dimension_numbers<[1], [0], [0], [1], [0, 0, 1, 1], [], []>} : vector<128x8xf32>, vector<8x16xf32>, vector<128x16xf32> -> vector<128x16xf32>
    %12 = arith.addf %4, %11 : vector<128x16xf32>
    %c1_i32 = arith.constant 1 : i32
    %13 = arith.addi %3, %c1_i32 : i32
    %c0_6 = arith.constant 0 : index
    %14 = arith.index_cast %13 : i32 to index
    %c0_7 = arith.constant 0 : index
    %15 = vector.load %arg2[%c0_6, %14, %c0_7] : memref<1x130x8xf32, #tpu.memory_space<vmem>>, vector<1x128x8xf32>
    %16 = vector.shape_cast %15 : vector<1x128x8xf32> to vector<128x8xf32>
    %c1 = arith.constant 1 : index
    %c0_8 = arith.constant 0 : index
    %c0_9 = arith.constant 0 : index
    %17 = vector.load %arg3[%c1, %c0_8, %c0_9] : memref<3x8x16xf32, #tpu.memory_space<vmem>>, vector<1x8x16xf32>
    %18 = vector.shape_cast %17 : vector<1x8x16xf32> to vector<8x16xf32>
    %cst_10 = arith.constant dense<0.000000e+00> : vector<128x16xf32>
    %19 = tpu.matmul %16, %18, %cst_10 {dimension_numbers = #tpu.dot_dimension_numbers<[1], [0], [0], [1], [0, 0, 1, 1], [], []>} : vector<128x8xf32>, vector<8x16xf32>, vector<128x16xf32> -> vector<128x16xf32>
    %20 = arith.addf %12, %19 : vector<128x16xf32>
    %c2_i32 = arith.constant 2 : i32
    %21 = arith.addi %3, %c2_i32 : i32
    %c0_11 = arith.constant 0 : index
    %22 = arith.index_cast %21 : i32 to index
    %c0_12 = arith.constant 0 : index
    %23 = vector.load %arg2[%c0_11, %22, %c0_12] : memref<1x130x8xf32, #tpu.memory_space<vmem>>, vector<1x128x8xf32>
    %24 = vector.shape_cast %23 : vector<1x128x8xf32> to vector<128x8xf32>
    %c2 = arith.constant 2 : index
    %c0_13 = arith.constant 0 : index
    %c0_14 = arith.constant 0 : index
    %25 = vector.load %arg3[%c2, %c0_13, %c0_14] : memref<3x8x16xf32, #tpu.memory_space<vmem>>, vector<1x8x16xf32>
    %26 = vector.shape_cast %25 : vector<1x8x16xf32> to vector<8x16xf32>
    %cst_15 = arith.constant dense<0.000000e+00> : vector<128x16xf32>
    %27 = tpu.matmul %24, %26, %cst_15 {dimension_numbers = #tpu.dot_dimension_numbers<[1], [0], [0], [1], [0, 0, 1, 1], [], []>} : vector<128x8xf32>, vector<8x16xf32>, vector<128x16xf32> -> vector<128x16xf32>
    %28 = arith.addf %20, %27 : vector<128x16xf32>
    %c0_16 = arith.constant 0 : index
    %c0_17 = arith.constant 0 : index
    %c0_18 = arith.constant 0 : index
    %29 = vector.load %arg4[%c0_16, %c0_17, %c0_18] : memref<1x128x16xf32, #tpu.memory_space<vmem>>, vector<1x128x16xf32>
    %30 = vector.shape_cast %29 : vector<1x128x16xf32> to vector<128x16xf32>
    %31 = vector.shape_cast %28 : vector<128x16xf32> to vector<1x128x16xf32>
    tpu.vector_store %arg4[%c0_16, %c0_17, %c0_18], %31 {strides = array<i32>} : memref<1x128x16xf32, #tpu.memory_space<vmem>>, vector<1x128x16xf32>,
    return
  }
  func.func @transform_0(%arg0: i32, %arg1: i32) -> (i32, i32, i32) {
    %c0_i32 = arith.constant 0 : i32
    %c0_i32_0 = arith.constant 0 : i32
    %c0_i32_1 = arith.constant 0 : i32
    return %arg0, %c0_i32, %c0_i32_0 : i32, i32, i32
  }
  func.func @transform_1(%arg0: i32, %arg1: i32) -> (i32, i32, i32) {
    %c0_i32 = arith.constant 0 : i32
    %c0_i32_0 = arith.constant 0 : i32
    %c0_i32_1 = arith.constant 0 : i32
    %c0_i32_2 = arith.constant 0 : i32
    return %c0_i32, %c0_i32_0, %c0_i32_1 : i32, i32, i32
  }
  func.func @transform_2(%arg0: i32, %arg1: i32) -> (i32, i32, i32) {
    %c0_i32 = arith.constant 0 : i32
    %c0_i32_0 = arith.constant 0 : i32
    return %arg0, %arg1, %c0_i32 : i32, i32, i32
  }
}

</mosaic_0001>

<llo_original>
// kernel: tpu_custom_call.1
$region0: #{tpu_custom_call.1}
  #allocation0 [shape = 'u32[]', space=smem, size = 0x4, offset = 0x4, fixed_abs, tag = 'smem constant byte address 0x4 - core index']
  #allocation1 [shape = 'u32[144,128]{1,0:T(1,128)}', space=vmem, size = 0x12000, scoped, tag = 'internal scratch']
  %s0 = inlined_call_operand.vmem [shape: f32[2,130,8], index: 0, kind: input, shape index: {}]
  %s1 = inlined_call_operand.vmem [shape: f32[3,8,16], index: 1, kind: input, shape index: {}]
  %s2 = inlined_call_operand.vmem [shape: f32[2,128,16], index: 2, kind: output, shape index: {}]
  %s3 = sld [smem:[#allocation0]]
  $region41: #{tpu_custom_call.1} parent=0
    _
  %s5 = ssub.s32 1, %s3
  %s6 = scalar_select 0, %s5, %s3
  loop: start=0, step=1, limit=4
  $region2: #{tpu_custom_call.1} parent=0 // loop_pre_header
    _
  $region3: #{tpu_custom_call.1} parent=0 // loop_header
    %s8 = sphi 0, %s12
    %p9 = scmp.ge.s32.totalorder %s8, 4
    %s15 = sphi 0, %s27
    %s16 = sphi 0, %s23
    %s17 = sphi 0, %s15
    %s18 = sphi 0, %s16
    %s19 = sphi 0, %s17
    %s20 = sphi 0, %s18
    %s30 = sphi 0, %s32
    %s33 = sphi 0, %s30
    %s34 = sphi 0, %s33
    %s50 = sphi 0, %s34
    %s54 = sphi 0, %s54
    %s56 = sphi 0, %s54
    %s57 = sphi 0, %s56
    %s71 = sphi 0, %s57
    %s79 = sphi 0, %s81
    %s82 = sphi 0, %s79
    %s83 = sphi 0, %s82
    %s99 = sphi 0, %s83
  $region4: #{tpu_custom_call.1} parent=0 // loop_header_branch
    %11 = sbr.rel (%p9) target = $region8
  $region5: #{tpu_custom_call.1} parent=0 // loop_body
    %s13 = ssub.s32 %s8, 1
    %s14 = ssub.s32 %s8, 2
    %s21 = sadd.s32 1, %s16
    %p22 = scmp.ge.s32.totalorder %s21, 1
    %s23 = scalar_select %p22, 0, %s21
    %s24 = sadd.s32 1, %s15
    %s25 = scalar_select %p22, %s24, %s15
    %p26 = scmp.ge.s32.totalorder %s25, 2
    %s27 = scalar_select %p26, 0, %s25
    %s28 = ssub.s32 %s15, %s27
    %p29 = scmp.eq.s32.totalorder %s28, 0
    %s31 = sadd.s32 %s30, 1
    %s32 = scalar_select %p29, %s30, %s31
    %p35 = pneg %p29
    %p36 = scmp.eq.s32.totalorder %s8, 1
    %p37 = por %p35, %p36
    %p38 = scmp.ne.s32.totalorder %s30, %s33
    %p39 = scmp.eq.s32.totalorder %s8, 0
    %p40 = por %p38, %p39
    %p41 = scmp.ne.s32.totalorder %s30, %s33
    %p42 = scmp.eq.s32.totalorder %s13, 1
    %p43 = por %p41, %p42
    %p44 = scmp.ne.s32.totalorder %s33, %s34
    %p45 = scmp.eq.s32.totalorder %s13, 0
    %p46 = por %p44, %p45
    %p47 = scmp.ne.s32.totalorder %s33, %s34
    %p48 = scmp.eq.s32.totalorder %s14, 1
    %p49 = por %p47, %p48
    %p51 = scmp.ne.s32.totalorder %s34, %s50
    %p52 = scmp.eq.s32.totalorder %s14, 0
    %p53 = por %p51, %p52
    %s55 = sadd.s32 %s54, 1
    %p58 = scmp.eq.s32.totalorder %s8, 1
    %p59 = scmp.ne.s32.totalorder %s54, %s56
    %p60 = scmp.eq.s32.totalorder %s8, 0
    %p61 = por %p59, %p60
    %p62 = scmp.ne.s32.totalorder %s54, %s56
    %p63 = scmp.eq.s32.totalorder %s13, 1
    %p64 = por %p62, %p63
    %p65 = scmp.ne.s32.totalorder %s56, %s57
    %p66 = scmp.eq.s32.totalorder %s13, 0
    %p67 = por %p65, %p66
    %p68 = scmp.ne.s32.totalorder %s56, %s57
    %p69 = scmp.eq.s32.totalorder %s14, 1
    %p70 = por %p68, %p69
    %p72 = scmp.ne.s32.totalorder %s57, %s71
    %p73 = scmp.eq.s32.totalorder %s14, 0
    %p74 = por %p72, %p73
    %s75 = ssub.s32 %s15, %s27
    %s76 = ssub.s32 %s16, %s23
    %s77 = sor.u32 %s75, %s76
    %p78 = scmp.eq.s32.totalorder %s77, 0
    %s80 = sadd.s32 %s79, 1
    %s81 = scalar_select %p78, %s79, %s80
    %p84 = pneg %p78
    %p85 = scmp.eq.s32.totalorder %s8, 1
    %p86 = por %p84, %p85
    %p87 = scmp.ne.s32.totalorder %s79, %s82
    %p88 = scmp.eq.s32.totalorder %s8, 0
    %p89 = por %p87, %p88
    %p90 = scmp.ne.s32.totalorder %s79, %s82
    %p91 = scmp.eq.s32.totalorder %s13, 1
    %p92 = por %p90, %p91
    %p93 = scmp.ne.s32.totalorder %s82, %s83
    %p94 = scmp.eq.s32.totalorder %s13, 0
    %p95 = por %p93, %p94
    %p96 = scmp.ne.s32.totalorder %s82, %s83
    %p97 = scmp.eq.s32.totalorder %s14, 1
    %p98 = por %p96, %p97
    %p100 = scmp.ne.s32.totalorder %s83, %s99
    %p101 = scmp.eq.s32.totalorder %s14, 0
    %p102 = por %p100, %p101
    %p103 = scmp.le.s32.totalorder 1, %s8
    %p104 = scmp.lt.s32.totalorder %s8, 3
    %p105 = pnand %p103, %p104
    %p106 = pneg %p105
    // Predicated region
    $region9: #{tpu_custom_call.1} parent=5 // pred_check
      _
    $region10: #{tpu_custom_call.1} parent=5 // pred_check_branch
      %108 = sbr.rel (%p105) target = $region12
    $region11: #{tpu_custom_call.1} parent=5 // pred_region
      %s109 = ssub.s32 %s8, 1
      // Predicated region
      $region13: #{tpu_custom_call.1} parent=11 // pred_check
        %p110 = pneg %p67
      $region14: #{tpu_custom_call.1} parent=11 // pred_check_branch
        %112 = sbr.rel (%p110) target = $region16
      $region15: #{tpu_custom_call.1} parent=11 // pred_region
        _
      $region16: #{tpu_custom_call.1} parent=11 // pred_fallthru
        _
    $region12: #{tpu_custom_call.1} parent=5 // pred_fallthru
      _
    %p113 = scmp.lt.s32.totalorder %s8, 2
    // Predicated region
    $region17: #{tpu_custom_call.1} parent=5 // pred_check
      %p114 = pneg %p113
    $region18: #{tpu_custom_call.1} parent=5 // pred_check_branch
      %116 = sbr.rel (%p114) target = $region20
    $region19: #{tpu_custom_call.1} parent=5 // pred_region
      // Predicated region
      $region21: #{tpu_custom_call.1} parent=19 // pred_check
        %p117 = pneg %p40
      $region22: #{tpu_custom_call.1} parent=19 // pred_check_branch
        %119 = sbr.rel (%p117) target = $region24
      $region23: #{tpu_custom_call.1} parent=19 // pred_region
        %p120 = scmp.lt.s32.totalorder %s15, 1
        %s121 = scalar_select %p120, %s15, 1
        %s122 = smul.addr %s121, 17
        %s123 = smul.addr %s122, 8
        %s124 = scalar_lea.vmem %s0, %s123
      $region24: #{tpu_custom_call.1} parent=19 // pred_fallthru
        _
    $region20: #{tpu_custom_call.1} parent=5 // pred_fallthru
      _
    %p125 = scmp.le.s32.totalorder 1, %s8
    %p126 = scmp.lt.s32.totalorder %s8, 3
    %p127 = pnand %p125, %p126
    %p128 = pneg %p127
    // Predicated region
    $region25: #{tpu_custom_call.1} parent=5 // pred_check
      _
    $region26: #{tpu_custom_call.1} parent=5 // pred_check_branch
      %130 = sbr.rel (%p127) target = $region28
    $region27: #{tpu_custom_call.1} parent=5 // pred_region
      %s131 = ssub.s32 %s8, 1
      %p132 = scmp.lt.s32.totalorder %s17, 1
      %s133 = scalar_select %p132, %s17, 1
      %s134 = smul.addr %s133, 17
      %s135 = smul.addr %s134, 8
      %s136 = scalar_lea.vmem %s0, %s135
      %p137 = pneg %p46
      %p138 = pneg %p43
      %p139 = pneg %p67
      %p140 = pneg %p64
      %p141 = pneg %p95
      %p142 = pneg %p92
      %s143 = smul.u32 16, %s18
      %p144 = scmp.lt.s32.totalorder %s17, 1
      %s145 = scalar_select %p144, %s17, 1
      %p146 = scmp.lt.s32.totalorder %s143, 15
      %s147 = scalar_select %p146, %s143, 15
      %s148 = smul.addr %s145, 16
      %s149 = sadd.s32 %s147, %s148
      %s150 = smul.addr %s149, 8
      %s151 = scalar_lea.vmem %s2, %s150
      %p152 = scmp.lt.s32.totalorder %s17, 1
      %s153 = scalar_select %p152, %s17, 1
      %s154 = smul.addr %s153, 17
      %s155 = smul.addr %s154, 8
      %s156 = scalar_lea.vmem %s0, %s155
      %s157 = smul.u32 16, %s18
      %p158 = scmp.lt.s32.totalorder %s17, 1
      %s159 = scalar_select %p158, %s17, 1
      %p160 = scmp.lt.s32.totalorder %s157, 15
      %s161 = scalar_select %p160, %s157, 15
      %s162 = smul.addr %s159, 16
      %s163 = sadd.s32 %s161, %s162
      %s164 = smul.addr %s163, 8
      %s165 = scalar_lea.vmem %s2, %s164
      %s166 = smul.u32 16, %s18
      %s167 = smul.u32 %s18, 128
      %s168 = scalar_lea.vmem %s156, %s167
      %v169 = vld [vmem:[%s168] sm:$0xff]
      %v170 = vld [vmem:[%s168 + $0x8] sm:$0xff]
      %v171 = vld [vmem:[%s168 + $0x10] sm:$0xff]
      %v172 = vld [vmem:[%s168 + $0x18] sm:$0xff]
      %v173 = vld [vmem:[%s168 + $0x20] sm:$0xff]
      %v174 = vld [vmem:[%s168 + $0x28] sm:$0xff]
      %v175 = vld [vmem:[%s168 + $0x30] sm:$0xff]
      %v176 = vld [vmem:[%s168 + $0x38] sm:$0xff]
      %v177 = vld [vmem:[%s168 + $0x40] sm:$0xff]
      %v178 = vld [vmem:[%s168 + $0x48] sm:$0xff]
      %v179 = vld [vmem:[%s168 + $0x50] sm:$0xff]
      %v180 = vld [vmem:[%s168 + $0x58] sm:$0xff]
      %v181 = vld [vmem:[%s168 + $0x60] sm:$0xff]
      %v182 = vld [vmem:[%s168 + $0x68] sm:$0xff]
      %v183 = vld [vmem:[%s168 + $0x70] sm:$0xff]
      %v184 = vld [vmem:[%s168 + $0x78] sm:$0xff]
      %v185 = vld [vmem:[%s1] sm:$0xff]
      %s186 = sadd.s32 %s167, 1
      %s187 = scalar_lea.vmem %s156, %s186
      %v188 = vld [vmem:[%s187] sm:$0xff]
      %v189 = vld [vmem:[%s187 + $0x8] sm:$0xff]
      %v190 = vld [vmem:[%s187 + $0x10] sm:$0xff]
      %v191 = vld [vmem:[%s187 + $0x18] sm:$0xff]
      %v192 = vld [vmem:[%s187 + $0x20] sm:$0xff]
      %v193 = vld [vmem:[%s187 + $0x28] sm:$0xff]
      %v194 = vld [vmem:[%s187 + $0x30] sm:$0xff]
      %v195 = vld [vmem:[%s187 + $0x38] sm:$0xff]
      %v196 = vld [vmem:[%s187 + $0x40] sm:$0xff]
      %v197 = vld [vmem:[%s187 + $0x48] sm:$0xff]
      %v198 = vld [vmem:[%s187 + $0x50] sm:$0xff]
      %v199 = vld [vmem:[%s187 + $0x58] sm:$0xff]
      %v200 = vld [vmem:[%s187 + $0x60] sm:$0xff]
      %v201 = vld [vmem:[%s187 + $0x68] sm:$0xff]
      %v202 = vld [vmem:[%s187 + $0x70] sm:$0xff]
      %v203 = vld [vmem:[%s187 + $0x78] sm:$0xff]
      %s204 = scalar_lea.vmem %s1, 8
      %v205 = vld [vmem:[%s204] sm:$0xff]
      %vm206 = vcmask 64512
      %v208 = vsel %vm206, %v188, 0
      %v211 = vsel %vm206, %v189, 0
      %v214 = vsel %vm206, %v190, 0
      %v217 = vsel %vm206, %v191, 0
      %v220 = vsel %vm206, %v192, 0
      %v223 = vsel %vm206, %v193, 0
      %v226 = vsel %vm206, %v194, 0
      %v229 = vsel %vm206, %v195, 0
      %v232 = vsel %vm206, %v196, 0
      %v235 = vsel %vm206, %v197, 0
      %v238 = vsel %vm206, %v198, 0
      %v241 = vsel %vm206, %v199, 0
      %v244 = vsel %vm206, %v200, 0
      %v247 = vsel %vm206, %v201, 0
      %v250 = vsel %vm206, %v202, 0
      %v253 = vsel %vm206, %v203, 0
      %255 = vmatprep.subr.mxu0 0.0
      %256 = vmatpush1.msra.mxu0 %v205
      %257 = vmatprep.subr.mxu0 0.0
      %258 = vmatpush1.msra.mxu0 0.0
      %259 = vmatprep.subr.mxu0 0.0
      %260 = vmatpush1.msra.mxu0 0.0
      %261 = vmatprep.subr.mxu0 0.0
      %262 = vmatpush1.msra.mxu0 0.0
      %263 = vmatprep.subr.mxu0 0.0
      %264 = vmatpush1.msra.mxu0 0.0
      %265 = vmatprep.subr.mxu0 0.0
      %266 = vmatpush1.msra.mxu0 0.0
      %267 = vmatprep.subr.mxu0 0.0
      %268 = vmatpush1.msra.mxu0 0.0
      %269 = vmatprep.subr.mxu0 0.0
      %270 = vmatpush1.msra.mxu0 0.0
      %271 = vmatprep.subr.mxu0 0.0
      %272 = vmatpush1.msra.mxu0 0.0
      %273 = vmatprep.subr.mxu0 0.0
      %274 = vmatpush1.msra.mxu0 0.0
      %275 = vmatprep.subr.mxu0 0.0
      %276 = vmatpush1.msra.mxu0 0.0
      %277 = vmatprep.subr.mxu0 0.0
      %278 = vmatpush1.msra.mxu0 0.0
      %279 = vmatprep.subr.mxu0 0.0
      %280 = vmatpush1.msra.mxu0 0.0
      %281 = vmatprep.subr.mxu0 0.0
      %282 = vmatpush1.msra.mxu0 0.0
      %283 = vmatprep.subr.mxu0 0.0
      %284 = vmatpush1.msra.mxu0 0.0
      %285 = vmatprep.subr.mxu0 0.0
      %286 = vmatpush1.msra.mxu0 0.0
      %287 = vmatprep.subr.mxu0 0.0
      %288 = vmatpush1.msra.mxu0 0.0
      %289 = vmatprep.subr.mxu0 0.0
      %290 = vmatpush1.msra.mxu0 0.0
      %291 = vmatprep.subr.mxu0 0.0
      %292 = vmatpush1.msra.mxu0 0.0
      %293 = vmatprep.subr.mxu0 0.0
      %294 = vmatpush1.msra.mxu0 0.0
      %295 = vmatprep.subr.mxu0 0.0
      %296 = vmatpush1.msra.mxu0 0.0
      %297 = vmatprep.subr.mxu0 0.0
      %298 = vmatpush1.msra.mxu0 0.0
      %299 = vmatprep.subr.mxu0 0.0
      %300 = vmatpush1.msra.mxu0 0.0
      %301 = vmatprep.subr.mxu0 0.0
      %302 = vmatpush1.msra.mxu0 0.0
      %303 = vmatprep.subr.mxu0 0.0
      %304 = vmatpush1.msra.mxu0 0.0
      %305 = vmatprep.subr.mxu0 0.0
      %306 = vmatpush1.msra.mxu0 0.0
      %307 = vmatprep.subr.mxu0 0.0
      %308 = vmatpush1.msra.mxu0 0.0
      %309 = vmatprep.subr.mxu0 0.0
      %310 = vmatpush1.msra.mxu0 0.0
      %311 = vmatprep.subr.mxu0 0.0
      %312 = vmatpush1.msra.mxu0 0.0
      %313 = vmatprep.subr.mxu0 0.0
      %314 = vmatpush1.msra.mxu0 0.0
      %315 = vmatprep.subr.mxu0 0.0
      %316 = vmatpush1.msra.mxu0 0.0
      %317 = vmatprep.subr.mxu0 0.0
      %318 = vmatpush1.msra.mxu0 0.0
      %319 = vmatprep.mubr.f32.mxu0 0.0
      %320 = vmatmul.mubr.f32.gmra.mrb[0].mxu0 %v208
      %v321 = vpop.f32.mrb[0].mxu0
      %v322 = vadd.f32 0.0, %v321
      %v323 = vpop.f32.mrb[0].mxu0
      %324 = vmatprep.mubr.f32.mxu0 0.0
      %325 = vmatmul.mubr.f32.gmra.mrb[0].mxu0 %v211
      %v326 = vpop.f32.mrb[0].mxu0
      %v327 = vadd.f32 0.0, %v326
      %v328 = vpop.f32.mrb[0].mxu0
      %329 = vmatprep.mubr.f32.mxu0 0.0
      %330 = vmatmul.mubr.f32.gmra.mrb[0].mxu0 %v214
      %v331 = vpop.f32.mrb[0].mxu0
      %v332 = vadd.f32 0.0, %v331
      %v333 = vpop.f32.mrb[0].mxu0
      %334 = vmatprep.mubr.f32.mxu0 0.0
      %335 = vmatmul.mubr.f32.gmra.mrb[0].mxu0 %v217
      %v336 = vpop.f32.mrb[0].mxu0
      %v337 = vadd.f32 0.0, %v336
      %v338 = vpop.f32.mrb[0].mxu0
      %339 = vmatprep.mubr.f32.mxu0 0.0
      %340 = vmatmul.mubr.f32.gmra.mrb[0].mxu0 %v220
      %v341 = vpop.f32.mrb[0].mxu0
      %v342 = vadd.f32 0.0, %v341
      %v343 = vpop.f32.mrb[0].mxu0
      %344 = vmatprep.mubr.f32.mxu0 0.0
      %345 = vmatmul.mubr.f32.gmra.mrb[0].mxu0 %v223
      %v346 = vpop.f32.mrb[0].mxu0
      %v347 = vadd.f32 0.0, %v346
      %v348 = vpop.f32.mrb[0].mxu0
      %349 = vmatprep.mubr.f32.mxu0 0.0
      %350 = vmatmul.mubr.f32.gmra.mrb[0].mxu0 %v226
      %v351 = vpop.f32.mrb[0].mxu0
      %v352 = vadd.f32 0.0, %v351
      %v353 = vpop.f32.mrb[0].mxu0
      %354 = vmatprep.mubr.f32.mxu0 0.0
      %355 = vmatmul.mubr.f32.gmra.mrb[0].mxu0 %v229
      %v356 = vpop.f32.mrb[0].mxu0
      %v357 = vadd.f32 0.0, %v356
      %v358 = vpop.f32.mrb[0].mxu0
      %359 = vmatprep.mubr.f32.mxu0 0.0
      %360 = vmatmul.mubr.f32.gmra.mrb[0].mxu0 %v232
      %v361 = vpop.f32.mrb[0].mxu0
      %v362 = vadd.f32 0.0, %v361
      %v363 = vpop.f32.mrb[0].mxu0
      %364 = vmatprep.mubr.f32.mxu0 0.0
      %365 = vmatmul.mubr.f32.gmra.mrb[0].mxu0 %v235
      %v366 = vpop.f32.mrb[0].mxu0
      %v367 = vadd.f32 0.0, %v366
      %v368 = vpop.f32.mrb[0].mxu0
      %369 = vmatprep.mubr.f32.mxu0 0.0
      %370 = vmatmul.mubr.f32.gmra.mrb[0].mxu0 %v238
      %v371 = vpop.f32.mrb[0].mxu0
      %v372 = vadd.f32 0.0, %v371
      %v373 = vpop.f32.mrb[0].mxu0
      %374 = vmatprep.mubr.f32.mxu0 0.0
      %375 = vmatmul.mubr.f32.gmra.mrb[0].mxu0 %v241
      %v376 = vpop.f32.mrb[0].mxu0
      %v377 = vadd.f32 0.0, %v376
      %v378 = vpop.f32.mrb[0].mxu0
      %379 = vmatprep.mubr.f32.mxu0 0.0
      %380 = vmatmul.mubr.f32.gmra.mrb[0].mxu0 %v244
      %v381 = vpop.f32.mrb[0].mxu0
      %v382 = vadd.f32 0.0, %v381
      %v383 = vpop.f32.mrb[0].mxu0
      %384 = vmatprep.mubr.f32.mxu0 0.0
      %385 = vmatmul.mubr.f32.gmra.mrb[0].mxu0 %v247
      %v386 = vpop.f32.mrb[0].mxu0
      %v387 = vadd.f32 0.0, %v386
      %v388 = vpop.f32.mrb[0].mxu0
      %389 = vmatprep.mubr.f32.mxu0 0.0
      %390 = vmatmul.mubr.f32.gmra.mrb[0].mxu0 %v250
      %v391 = vpop.f32.mrb[0].mxu0
      %v392 = vadd.f32 0.0, %v391
      %v393 = vpop.f32.mrb[0].mxu0
      %394 = vmatprep.mubr.f32.mxu0 0.0
      %395 = vmatmul.mubr.f32.gmra.mrb[0].mxu0 %v253
      %v396 = vpop.f32.mrb[0].mxu0
      %v397 = vadd.f32 0.0, %v396
      %v398 = vpop.f32.mrb[0].mxu0
      %399 = vdwg.mxu0
      %v401 = vsel %vm206, %v169, 0
      %v404 = vsel %vm206, %v170, 0
      %v407 = vsel %vm206, %v171, 0
      %v410 = vsel %vm206, %v172, 0
      %v413 = vsel %vm206, %v173, 0
      %v416 = vsel %vm206, %v174, 0
      %v419 = vsel %vm206, %v175, 0
      %v422 = vsel %vm206, %v176, 0
      %v425 = vsel %vm206, %v177, 0
      %v428 = vsel %vm206, %v178, 0
      %v431 = vsel %vm206, %v179, 0
      %v434 = vsel %vm206, %v180, 0
      %v437 = vsel %vm206, %v181, 0
      %v440 = vsel %vm206, %v182, 0
      %v443 = vsel %vm206, %v183, 0
      %v446 = vsel %vm206, %v184, 0
      %448 = vmatprep.subr.mxu0 0.0
      %449 = vmatpush1.msra.mxu0 %v185
      %450 = vmatprep.subr.mxu0 0.0
      %451 = vmatpush1.msra.mxu0 0.0
      %452 = vmatprep.subr.mxu0 0.0
      %453 = vmatpush1.msra.mxu0 0.0
      %454 = vmatprep.subr.mxu0 0.0
      %455 = vmatpush1.msra.mxu0 0.0
      %456 = vmatprep.subr.mxu0 0.0
      %457 = vmatpush1.msra.mxu0 0.0
      %458 = vmatprep.subr.mxu0 0.0
      %459 = vmatpush1.msra.mxu0 0.0
      %460 = vmatprep.subr.mxu0 0.0
      %461 = vmatpush1.msra.mxu0 0.0
      %462 = vmatprep.subr.mxu0 0.0
      %463 = vmatpush1.msra.mxu0 0.0
      %464 = vmatprep.subr.mxu0 0.0
      %465 = vmatpush1.msra.mxu0 0.0
      %466 = vmatprep.subr.mxu0 0.0
      %467 = vmatpush1.msra.mxu0 0.0
      %468 = vmatprep.subr.mxu0 0.0
      %469 = vmatpush1.msra.mxu0 0.0
      %470 = vmatprep.subr.mxu0 0.0
      %471 = vmatpush1.msra.mxu0 0.0
      %472 = vmatprep.subr.mxu0 0.0
      %473 = vmatpush1.msra.mxu0 0.0
      %474 = vmatprep.subr.mxu0 0.0
      %475 = vmatpush1.msra.mxu0 0.0
      %476 = vmatprep.subr.mxu0 0.0
      %477 = vmatpush1.msra.mxu0 0.0
      %478 = vmatprep.subr.mxu0 0.0
      %479 = vmatpush1.msra.mxu0 0.0
      %480 = vmatprep.subr.mxu0 0.0
      %481 = vmatpush1.msra.mxu0 0.0
      %482 = vmatprep.subr.mxu0 0.0
      %483 = vmatpush1.msra.mxu0 0.0
      %484 = vmatprep.subr.mxu0 0.0
      %485 = vmatpush1.msra.mxu0 0.0
      %486 = vmatprep.subr.mxu0 0.0
      %487 = vmatpush1.msra.mxu0 0.0
      %488 = vmatprep.subr.mxu0 0.0
      %489 = vmatpush1.msra.mxu0 0.0
      %490 = vmatprep.subr.mxu0 0.0
      %491 = vmatpush1.msra.mxu0 0.0
      %492 = vmatprep.subr.mxu0 0.0
      %493 = vmatpush1.msra.mxu0 0.0
      %494 = vmatprep.subr.mxu0 0.0
      %495 = vmatpush1.msra.mxu0 0.0
      %496 = vmatprep.subr.mxu0 0.0
      %497 = vmatpush1.msra.mxu0 0.0
      %498 = vmatprep.subr.mxu0 0.0
      %499 = vmatpush1.msra.mxu0 0.0
      %500 = vmatprep.subr.mxu0 0.0
      %501 = vmatpush1.msra.mxu0 0.0
      %502 = vmatprep.subr.mxu0 0.0
      %503 = vmatpush1.msra.mxu0 0.0
      %504 = vmatprep.subr.mxu0 0.0
      %505 = vmatpush1.msra.mxu0 0.0
      %506 = vmatprep.subr.mxu0 0.0
      %507 = vmatpush1.msra.mxu0 0.0
      %508 = vmatprep.subr.mxu0 0.0
      %509 = vmatpush1.msra.mxu0 0.0
      %510 = vmatprep.subr.mxu0 0.0
      %511 = vmatpush1.msra.mxu0 0.0
      %512 = vmatprep.mubr.f32.mxu0 0.0
      %513 = vmatmul.mubr.f32.gmra.mrb[0].mxu0 %v401
      %v514 = vpop.f32.mrb[0].mxu0
      %v515 = vadd.f32 %v322, %v514
      %v516 = vpop.f32.mrb[0].mxu0
      %517 = vmatprep.mubr.f32.mxu0 0.0
      %518 = vmatmul.mubr.f32.gmra.mrb[0].mxu0 %v404
      %v519 = vpop.f32.mrb[0].mxu0
      %v520 = vadd.f32 %v327, %v519
      %v521 = vpop.f32.mrb[0].mxu0
      %522 = vmatprep.mubr.f32.mxu0 0.0
      %523 = vmatmul.mubr.f32.gmra.mrb[0].mxu0 %v407
      %v524 = vpop.f32.mrb[0].mxu0
      %v525 = vadd.f32 %v332, %v524
      %v526 = vpop.f32.mrb[0].mxu0
      %527 = vmatprep.mubr.f32.mxu0 0.0
      %528 = vmatmul.mubr.f32.gmra.mrb[0].mxu0 %v410
      %v529 = vpop.f32.mrb[0].mxu0
      %v530 = vadd.f32 %v337, %v529
      %v531 = vpop.f32.mrb[0].mxu0
      %532 = vmatprep.mubr.f32.mxu0 0.0
      %533 = vmatmul.mubr.f32.gmra.mrb[0].mxu0 %v413
      %v534 = vpop.f32.mrb[0].mxu0
      %v535 = vadd.f32 %v342, %v534
      %v536 = vpop.f32.mrb[0].mxu0
      %537 = vmatprep.mubr.f32.mxu0 0.0
      %538 = vmatmul.mubr.f32.gmra.mrb[0].mxu0 %v416
      %v539 = vpop.f32.mrb[0].mxu0
      %v540 = vadd.f32 %v347, %v539
      %v541 = vpop.f32.mrb[0].mxu0
      %542 = vmatprep.mubr.f32.mxu0 0.0
      %543 = vmatmul.mubr.f32.gmra.mrb[0].mxu0 %v419
      %v544 = vpop.f32.mrb[0].mxu0
      %v545 = vadd.f32 %v352, %v544
      %v546 = vpop.f32.mrb[0].mxu0
      %547 = vmatprep.mubr.f32.mxu0 0.0
      %548 = vmatmul.mubr.f32.gmra.mrb[0].mxu0 %v422
      %v549 = vpop.f32.mrb[0].mxu0
      %v550 = vadd.f32 %v357, %v549
      %v551 = vpop.f32.mrb[0].mxu0
      %552 = vmatprep.mubr.f32.mxu0 0.0
      %553 = vmatmul.mubr.f32.gmra.mrb[0].mxu0 %v425
      %v554 = vpop.f32.mrb[0].mxu0
      %v555 = vadd.f32 %v362, %v554
      %v556 = vpop.f32.mrb[0].mxu0
      %557 = vmatprep.mubr.f32.mxu0 0.0
      %558 = vmatmul.mubr.f32.gmra.mrb[0].mxu0 %v428
      %v559 = vpop.f32.mrb[0].mxu0
      %v560 = vadd.f32 %v367, %v559
      %v561 = vpop.f32.mrb[0].mxu0
      %562 = vmatprep.mubr.f32.mxu0 0.0
      %563 = vmatmul.mubr.f32.gmra.mrb[0].mxu0 %v431
      %v564 = vpop.f32.mrb[0].mxu0
      %v565 = vadd.f32 %v372, %v564
      %v566 = vpop.f32.mrb[0].mxu0
      %567 = vmatprep.mubr.f32.mxu0 0.0
      %568 = vmatmul.mubr.f32.gmra.mrb[0].mxu0 %v434
      %v569 = vpop.f32.mrb[0].mxu0
      %v570 = vadd.f32 %v377, %v569
      %v571 = vpop.f32.mrb[0].mxu0
      %572 = vmatprep.mubr.f32.mxu0 0.0
      %573 = vmatmul.mubr.f32.gmra.mrb[0].mxu0 %v437
      %v574 = vpop.f32.mrb[0].mxu0
      %v575 = vadd.f32 %v382, %v574
      %v576 = vpop.f32.mrb[0].mxu0
      %577 = vmatprep.mubr.f32.mxu0 0.0
      %578 = vmatmul.mubr.f32.gmra.mrb[0].mxu0 %v440
      %v579 = vpop.f32.mrb[0].mxu0
      %v580 = vadd.f32 %v387, %v579
      %v581 = vpop.f32.mrb[0].mxu0
      %582 = vmatprep.mubr.f32.mxu0 0.0
      %583 = vmatmul.mubr.f32.gmra.mrb[0].mxu0 %v443
      %v584 = vpop.f32.mrb[0].mxu0
      %v585 = vadd.f32 %v392, %v584
      %v586 = vpop.f32.mrb[0].mxu0
      %587 = vmatprep.mubr.f32.mxu0 0.0
      %588 = vmatmul.mubr.f32.gmra.mrb[0].mxu0 %v446
      %v589 = vpop.f32.mrb[0].mxu0
      %v590 = vadd.f32 %v397, %v589
      %v591 = vpop.f32.mrb[0].mxu0
      %592 = vdwg.mxu0
      %s593 = sadd.s32 %s167, 2
      %s594 = scalar_lea.vmem %s156, %s593
      %v595 = vld [vmem:[%s594] sm:$0xff]
      %v596 = vld [vmem:[%s594 + $0x8] sm:$0xff]
      %v597 = vld [vmem:[%s594 + $0x10] sm:$0xff]
      %v598 = vld [vmem:[%s594 + $0x18] sm:$0xff]
      %v599 = vld [vmem:[%s594 + $0x20] sm:$0xff]
      %v600 = vld [vmem:[%s594 + $0x28] sm:$0xff]
      %v601 = vld [vmem:[%s594 + $0x30] sm:$0xff]
      %v602 = vld [vmem:[%s594 + $0x38] sm:$0xff]
      %v603 = vld [vmem:[%s594 + $0x40] sm:$0xff]
      %v604 = vld [vmem:[%s594 + $0x48] sm:$0xff]
      %v605 = vld [vmem:[%s594 + $0x50] sm:$0xff]
      %v606 = vld [vmem:[%s594 + $0x58] sm:$0xff]
      %v607 = vld [vmem:[%s594 + $0x60] sm:$0xff]
      %v608 = vld [vmem:[%s594 + $0x68] sm:$0xff]
      %v609 = vld [vmem:[%s594 + $0x70] sm:$0xff]
      %v610 = vld [vmem:[%s594 + $0x78] sm:$0xff]
      %s611 = scalar_lea.vmem %s1, 16
      %v612 = vld [vmem:[%s611] sm:$0xff]
      %v614 = vsel %vm206, %v595, 0
      %v617 = vsel %vm206, %v596, 0
      %v620 = vsel %vm206, %v597, 0
      %v623 = vsel %vm206, %v598, 0
      %v626 = vsel %vm206, %v599, 0
      %v629 = vsel %vm206, %v600, 0
      %v632 = vsel %vm206, %v601, 0
      %v635 = vsel %vm206, %v602, 0
      %v638 = vsel %vm206, %v603, 0
      %v641 = vsel %vm206, %v604, 0
      %v644 = vsel %vm206, %v605, 0
      %v647 = vsel %vm206, %v606, 0
      %v650 = vsel %vm206, %v607, 0
      %v653 = vsel %vm206, %v608, 0
      %v656 = vsel %vm206, %v609, 0
      %v659 = vsel %vm206, %v610, 0
      %661 = vmatprep.subr.mxu0 0.0
      %662 = vmatpush1.msra.mxu0 %v612
      %663 = vmatprep.subr.mxu0 0.0
      %664 = vmatpush1.msra.mxu0 0.0
      %665 = vmatprep.subr.mxu0 0.0
      %666 = vmatpush1.msra.mxu0 0.0
      %667 = vmatprep.subr.mxu0 0.0
      %668 = vmatpush1.msra.mxu0 0.0
      %669 = vmatprep.subr.mxu0 0.0
      %670 = vmatpush1.msra.mxu0 0.0
      %671 = vmatprep.subr.mxu0 0.0
      %672 = vmatpush1.msra.mxu0 0.0
      %673 = vmatprep.subr.mxu0 0.0
      %674 = vmatpush1.msra.mxu0 0.0
      %675 = vmatprep.subr.mxu0 0.0
      %676 = vmatpush1.msra.mxu0 0.0
      %677 = vmatprep.subr.mxu0 0.0
      %678 = vmatpush1.msra.mxu0 0.0
      %679 = vmatprep.subr.mxu0 0.0
      %680 = vmatpush1.msra.mxu0 0.0
      %681 = vmatprep.subr.mxu0 0.0
      %682 = vmatpush1.msra.mxu0 0.0
      %683 = vmatprep.subr.mxu0 0.0
      %684 = vmatpush1.msra.mxu0 0.0
      %685 = vmatprep.subr.mxu0 0.0
      %686 = vmatpush1.msra.mxu0 0.0
      %687 = vmatprep.subr.mxu0 0.0
      %688 = vmatpush1.msra.mxu0 0.0
      %689 = vmatprep.subr.mxu0 0.0
      %690 = vmatpush1.msra.mxu0 0.0
      %691 = vmatprep.subr.mxu0 0.0
      %692 = vmatpush1.msra.mxu0 0.0
      %693 = vmatprep.subr.mxu0 0.0
      %694 = vmatpush1.msra.mxu0 0.0
      %695 = vmatprep.subr.mxu0 0.0
      %696 = vmatpush1.msra.mxu0 0.0
      %697 = vmatprep.subr.mxu0 0.0
      %698 = vmatpush1.msra.mxu0 0.0
      %699 = vmatprep.subr.mxu0 0.0
      %700 = vmatpush1.msra.mxu0 0.0
      %701 = vmatprep.subr.mxu0 0.0
      %702 = vmatpush1.msra.mxu0 0.0
      %703 = vmatprep.subr.mxu0 0.0
      %704 = vmatpush1.msra.mxu0 0.0
      %705 = vmatprep.subr.mxu0 0.0
      %706 = vmatpush1.msra.mxu0 0.0
      %707 = vmatprep.subr.mxu0 0.0
      %708 = vmatpush1.msra.mxu0 0.0
      %709 = vmatprep.subr.mxu0 0.0
      %710 = vmatpush1.msra.mxu0 0.0
      %711 = vmatprep.subr.mxu0 0.0
      %712 = vmatpush1.msra.mxu0 0.0
      %713 = vmatprep.subr.mxu0 0.0
      %714 = vmatpush1.msra.mxu0 0.0
      %715 = vmatprep.subr.mxu0 0.0
      %716 = vmatpush1.msra.mxu0 0.0
      %717 = vmatprep.subr.mxu0 0.0
      %718 = vmatpush1.msra.mxu0 0.0
      %719 = vmatprep.subr.mxu0 0.0
      %720 = vmatpush1.msra.mxu0 0.0
      %721 = vmatprep.subr.mxu0 0.0
      %722 = vmatpush1.msra.mxu0 0.0
      %723 = vmatprep.subr.mxu0 0.0
      %724 = vmatpush1.msra.mxu0 0.0
      %725 = vmatprep.mubr.f32.mxu0 0.0
      %726 = vmatmul.mubr.f32.gmra.mrb[0].mxu0 %v614
      %v727 = vpop.f32.mrb[0].mxu0
      %v728 = vadd.f32 0.0, %v727
      %v729 = vpop.f32.mrb[0].mxu0
      %730 = vmatprep.mubr.f32.mxu0 0.0
      %731 = vmatmul.mubr.f32.gmra.mrb[0].mxu0 %v617
      %v732 = vpop.f32.mrb[0].mxu0
      %v733 = vadd.f32 0.0, %v732
      %v734 = vpop.f32.mrb[0].mxu0
      %735 = vmatprep.mubr.f32.mxu0 0.0
      %736 = vmatmul.mubr.f32.gmra.mrb[0].mxu0 %v620
      %v737 = vpop.f32.mrb[0].mxu0
      %v738 = vadd.f32 0.0, %v737
      %v739 = vpop.f32.mrb[0].mxu0
      %740 = vmatprep.mubr.f32.mxu0 0.0
      %741 = vmatmul.mubr.f32.gmra.mrb[0].mxu0 %v623
      %v742 = vpop.f32.mrb[0].mxu0
      %v743 = vadd.f32 0.0, %v742
      %v744 = vpop.f32.mrb[0].mxu0
      %745 = vmatprep.mubr.f32.mxu0 0.0
      %746 = vmatmul.mubr.f32.gmra.mrb[0].mxu0 %v626
      %v747 = vpop.f32.mrb[0].mxu0
      %v748 = vadd.f32 0.0, %v747
      %v749 = vpop.f32.mrb[0].mxu0
      %750 = vmatprep.mubr.f32.mxu0 0.0
      %751 = vmatmul.mubr.f32.gmra.mrb[0].mxu0 %v629
      %v752 = vpop.f32.mrb[0].mxu0
      %v753 = vadd.f32 0.0, %v752
      %v754 = vpop.f32.mrb[0].mxu0
      %755 = vmatprep.mubr.f32.mxu0 0.0
      %756 = vmatmul.mubr.f32.gmra.mrb[0].mxu0 %v632
      %v757 = vpop.f32.mrb[0].mxu0
      %v758 = vadd.f32 0.0, %v757
      %v759 = vpop.f32.mrb[0].mxu0
      %760 = vmatprep.mubr.f32.mxu0 0.0
      %761 = vmatmul.mubr.f32.gmra.mrb[0].mxu0 %v635
      %v762 = vpop.f32.mrb[0].mxu0
      %v763 = vadd.f32 0.0, %v762
      %v764 = vpop.f32.mrb[0].mxu0
      %765 = vmatprep.mubr.f32.mxu0 0.0
      %766 = vmatmul.mubr.f32.gmra.mrb[0].mxu0 %v638
      %v767 = vpop.f32.mrb[0].mxu0
      %v768 = vadd.f32 0.0, %v767
      %v769 = vpop.f32.mrb[0].mxu0
      %770 = vmatprep.mubr.f32.mxu0 0.0
      %771 = vmatmul.mubr.f32.gmra.mrb[0].mxu0 %v641
      %v772 = vpop.f32.mrb[0].mxu0
      %v773 = vadd.f32 0.0, %v772
      %v774 = vpop.f32.mrb[0].mxu0
      %775 = vmatprep.mubr.f32.mxu0 0.0
      %776 = vmatmul.mubr.f32.gmra.mrb[0].mxu0 %v644
      %v777 = vpop.f32.mrb[0].mxu0
      %v778 = vadd.f32 0.0, %v777
      %v779 = vpop.f32.mrb[0].mxu0
      %780 = vmatprep.mubr.f32.mxu0 0.0
      %781 = vmatmul.mubr.f32.gmra.mrb[0].mxu0 %v647
      %v782 = vpop.f32.mrb[0].mxu0
      %v783 = vadd.f32 0.0, %v782
      %v784 = vpop.f32.mrb[0].mxu0
      %785 = vmatprep.mubr.f32.mxu0 0.0
      %786 = vmatmul.mubr.f32.gmra.mrb[0].mxu0 %v650
      %v787 = vpop.f32.mrb[0].mxu0
      %v788 = vadd.f32 0.0, %v787
      %v789 = vpop.f32.mrb[0].mxu0
      %790 = vmatprep.mubr.f32.mxu0 0.0
      %791 = vmatmul.mubr.f32.gmra.mrb[0].mxu0 %v653
      %v792 = vpop.f32.mrb[0].mxu0
      %v793 = vadd.f32 0.0, %v792
      %v794 = vpop.f32.mrb[0].mxu0
      %795 = vmatprep.mubr.f32.mxu0 0.0
      %796 = vmatmul.mubr.f32.gmra.mrb[0].mxu0 %v656
      %v797 = vpop.f32.mrb[0].mxu0
      %v798 = vadd.f32 0.0, %v797
      %v799 = vpop.f32.mrb[0].mxu0
      %800 = vmatprep.mubr.f32.mxu0 0.0
      %801 = vmatmul.mubr.f32.gmra.mrb[0].mxu0 %v659
      %v802 = vpop.f32.mrb[0].mxu0
      %v803 = vadd.f32 0.0, %v802
      %v804 = vpop.f32.mrb[0].mxu0
      %805 = vdwg.mxu0
      %v806 = vadd.f32 %v515, %v728
      %v807 = vadd.f32 %v520, %v733
      %v808 = vadd.f32 %v525, %v738
      %v809 = vadd.f32 %v530, %v743
      %v810 = vadd.f32 %v535, %v748
      %v811 = vadd.f32 %v540, %v753
      %v812 = vadd.f32 %v545, %v758
      %v813 = vadd.f32 %v550, %v763
      %v814 = vadd.f32 %v555, %v768
      %v815 = vadd.f32 %v560, %v773
      %v816 = vadd.f32 %v565, %v778
      %v817 = vadd.f32 %v570, %v783
      %v818 = vadd.f32 %v575, %v788
      %v819 = vadd.f32 %v580, %v793
      %v820 = vadd.f32 %v585, %v798
      %v821 = vadd.f32 %v590, %v803
      %vm822 = vcmask 130048
      %823 = vst.msk [vmem:[%s165] sm:$0xff] %vm822, %v806
      %824 = vst.msk [vmem:[%s165 + $0x8] sm:$0xff] %vm822, %v807
      %825 = vst.msk [vmem:[%s165 + $0x10] sm:$0xff] %vm822, %v808
      %826 = vst.msk [vmem:[%s165 + $0x18] sm:$0xff] %vm822, %v809
      %827 = vst.msk [vmem:[%s165 + $0x20] sm:$0xff] %vm822, %v810
      %828 = vst.msk [vmem:[%s165 + $0x28] sm:$0xff] %vm822, %v811
      %829 = vst.msk [vmem:[%s165 + $0x30] sm:$0xff] %vm822, %v812
      %830 = vst.msk [vmem:[%s165 + $0x38] sm:$0xff] %vm822, %v813
      %831 = vst.msk [vmem:[%s165 + $0x40] sm:$0xff] %vm822, %v814
      %832 = vst.msk [vmem:[%s165 + $0x48] sm:$0xff] %vm822, %v815
      %833 = vst.msk [vmem:[%s165 + $0x50] sm:$0xff] %vm822, %v816
      %834 = vst.msk [vmem:[%s165 + $0x58] sm:$0xff] %vm822, %v817
      %835 = vst.msk [vmem:[%s165 + $0x60] sm:$0xff] %vm822, %v818
      %836 = vst.msk [vmem:[%s165 + $0x68] sm:$0xff] %vm822, %v819
      %837 = vst.msk [vmem:[%s165 + $0x70] sm:$0xff] %vm822, %v820
      %838 = vst.msk [vmem:[%s165 + $0x78] sm:$0xff] %vm822, %v821
      %s839 = smul.u32 16, %s18
      %p840 = scmp.lt.s32.totalorder %s17, 1
      %s841 = scalar_select %p840, %s17, 1
      %p842 = scmp.lt.s32.totalorder %s839, 15
      %s843 = scalar_select %p842, %s839, 15
      %s844 = smul.addr %s841, 16
      %s845 = sadd.s32 %s843, %s844
      %s846 = smul.addr %s845, 8
      %s847 = scalar_lea.vmem %s2, %s846
      // Predicated region
      $region29: #{tpu_custom_call.1} parent=27 // pred_check
        %p848 = pneg %p92
      $region30: #{tpu_custom_call.1} parent=27 // pred_check_branch
        %850 = sbr.rel (%p848) target = $region32
      $region31: #{tpu_custom_call.1} parent=27 // pred_region
        %s851 = smul.u32 16, %s18
      $region32: #{tpu_custom_call.1} parent=27 // pred_fallthru
        _
    $region28: #{tpu_custom_call.1} parent=5 // pred_fallthru
      _
    %p852 = scmp.le.s32.totalorder 2, %s8
    // Predicated region
    $region33: #{tpu_custom_call.1} parent=5 // pred_check
      %p853 = pneg %p852
    $region34: #{tpu_custom_call.1} parent=5 // pred_check_branch
      %855 = sbr.rel (%p853) target = $region36
    $region35: #{tpu_custom_call.1} parent=5 // pred_region
      %s856 = ssub.s32 %s8, 2
      // Predicated region
      $region37: #{tpu_custom_call.1} parent=35 // pred_check
        %p857 = pneg %p98
      $region38: #{tpu_custom_call.1} parent=35 // pred_check_branch
        %859 = sbr.rel (%p857) target = $region40
      $region39: #{tpu_custom_call.1} parent=35 // pred_region
        %s860 = smul.u32 16, %s20
        %p861 = scmp.lt.s32.totalorder %s19, 1
        %s862 = scalar_select %p861, %s19, 1
        %p863 = scmp.lt.s32.totalorder %s860, 15
        %s864 = scalar_select %p863, %s860, 15
        %s865 = smul.addr %s862, 16
        %s866 = sadd.s32 %s864, %s865
        %s867 = smul.addr %s866, 8
        %s868 = scalar_lea.vmem %s2, %s867
      $region40: #{tpu_custom_call.1} parent=35 // pred_fallthru
        _
    $region36: #{tpu_custom_call.1} parent=5 // pred_fallthru
      _
  $region6: #{tpu_custom_call.1} parent=0 // loop_footer
    %s12 = sadd.s32 1, %s8
  $region7: #{tpu_custom_call.1} parent=0 // loop_footer_branch
    %7 = sbr.rel target = $region3
  $region8: #{tpu_custom_call.1} parent=0 // loop_exit
    _

</llo_original>
